<compile_context>
chip_gen: v7x
topology: tpu7x:2x2x1
jax: 0.10.0
libtpu: 0.0.40
codegen_flags: <defaults>
</compile_context>

<pallas_src>
import jax
import jax.numpy as jnp
from jax import lax
from jax.experimental import pallas as pl
from jax.experimental.pallas import tpu as pltpu


def _round_up(x, m):
    return ((x + m - 1) // m) * m


def _gcn_kernel_proj_first(x_ref, w_ref, adj_ref, o_ref, trans_ref):
    """Used when Dout_pad <= Din_pad.

    x_ref:    (1, N_pad, Din_pad)   full X for the current batch
    w_ref:    (Din_pad, Dout_pad)   pre-transposed weight (shared)
    adj_ref:  (1, TM, N_pad)        one row-tile of the adjacency
    o_ref:    (1, TM, Dout_pad)
    trans_ref: VMEM scratch (N_pad, Dout_pad) f32 -- X @ Wt, computed once per batch.
    """
    @pl.when(pl.program_id(1) == 0)
    def _():
        trans_ref[...] = jnp.dot(
            x_ref[0], w_ref[...], preferred_element_type=jnp.float32
        )

    o_ref[0] = jnp.dot(
        adj_ref[0], trans_ref[...], preferred_element_type=jnp.float32
    ).astype(o_ref.dtype)


def _gcn_kernel_agg_first(x_ref, w_ref, adj_ref, o_ref):
    """Used when Din_pad < Dout_pad: (adj_tile @ X) @ Wt keeps the N^2 matmul narrow."""
    agg = jnp.dot(adj_ref[0], x_ref[0], preferred_element_type=jnp.float32)  # (TM, Din)
    o_ref[0] = jnp.dot(
        agg, w_ref[...], preferred_element_type=jnp.float32
    ).astype(o_ref.dtype)


def graph_convolution(adj, x, weight):
    """adj: (B, N, N), x: (B, N, Din), weight: (Dout, Din) -> (B, N, Dout)."""
    B, N, Din = x.shape
    Dout = weight.shape[0]
    assert adj.shape == (B, N, N)
    assert weight.shape == (Dout, Din)

    # Pad to lane-dense / MXU-friendly sizes. Zero padding does not change the math
    # (extra adj columns multiply zero rows of X; extra output rows/cols are sliced off).
    N_pad = _round_up(N, 128)
    Din_pad = _round_up(Din, 128)
    Dout_pad = _round_up(Dout, 128)
    # Row-tile of adjacency: 256 when it divides N_pad (good for v6e/v7x 256-wide MXU),
    # otherwise 128 (always divides N_pad; matches v5e's 128 granule).
    TM = 256 if (N_pad % 256 == 0 and N_pad > 256) else 128

    adj_p = jnp.pad(adj, ((0, 0), (0, N_pad - N), (0, N_pad - N)))
    x_p = jnp.pad(x, ((0, 0), (0, N_pad - N), (0, Din_pad - Din)))
    # Pre-transpose the weight once in the wrapper: (Dout, Din) -> (Din_pad, Dout_pad).
    w_t = jnp.pad(weight.T, ((0, Din_pad - Din), (0, Dout_pad - Dout)))

    grid = (B, N_pad // TM)
    in_specs = [
        pl.BlockSpec((1, N_pad, Din_pad), lambda b, i: (b, 0, 0)),    # X, full per batch
        pl.BlockSpec((Din_pad, Dout_pad), lambda b, i: (0, 0)),       # Wt, shared
        pl.BlockSpec((1, TM, N_pad), lambda b, i: (b, i, 0)),         # adj row tile
    ]
    out_specs = pl.BlockSpec((1, TM, Dout_pad), lambda b, i: (b, i, 0))

    if Dout_pad <= Din_pad:
        # Hoisted projection: trans scratch is reused across row tiles, so the
        # row-tile axis must be traversed sequentially ("arbitrary"); the batch
        # axis stays "parallel" for megacore sharding.
        kernel = _gcn_kernel_proj_first
        scratch_shapes = [pltpu.VMEM((N_pad, Dout_pad), jnp.float32)]
        dimension_semantics = ("parallel", "arbitrary")
    else:
        kernel = _gcn_kernel_agg_first
        scratch_shapes = []
        dimension_semantics = ("parallel", "parallel")

    out_p = pl.pallas_call(
        kernel,
        out_shape=jax.ShapeDtypeStruct((B, N_pad, Dout_pad), x.dtype),
        grid_spec=pltpu.PrefetchScalarGridSpec(
            num_scalar_prefetch=0,
            grid=grid,
            in_specs=in_specs,
            out_specs=out_specs,
            scratch_shapes=scratch_shapes,
        ),
        compiler_params=pltpu.CompilerParams(
            dimension_semantics=dimension_semantics,
            # For very large N / Din one would also cap TM and set vmem_limit_bytes;
            # the test shapes stay far under the default scoped VMEM limit.
        ),
    )(x_p, w_t, adj_p)

    return out_p[:, :N, :Dout]


if __name__ == "__main__":
    def run_case(B, N, Din, Dout):
        key = jax.random.PRNGKey(0)
        k_adj, k_x, k_w = jax.random.split(key, 3)

        # Row-normalized soft adjacency, features, and Linear-style weight.
        adj_raw = jax.random.uniform(k_adj, (B, N, N), dtype=jnp.float32)
        adj = adj_raw / jnp.sum(adj_raw, axis=-1, keepdims=True)
        x = jax.random.normal(k_x, (B, N, Din), dtype=jnp.float32)
        bound = 1.0 / jnp.sqrt(jnp.float32(Din))
        weight = jax.random.uniform(
            k_w, (Dout, Din), dtype=jnp.float32, minval=-bound, maxval=bound
        )

        out = jax.block_until_ready(graph_convolution(adj, x, weight))

        # Reference in plain JAX (same math as the PyTorch forward).
        trans = jnp.einsum("bnd,od->bno", x, weight,
                           precision=lax.Precision.HIGHEST)
        ref = jnp.einsum("bnm,bmd->bnd", adj, trans,
                         precision=lax.Precision.HIGHEST)
        assert out.shape == (B, N, Dout)
        assert jnp.allclose(out, ref, atol=5e-3, rtol=5e-3), (B, N, Din, Dout)

    # Original small example (proj-first path, single row tile).
    run_case(B=2, N=16, Din=32, Dout=64)
    # Din < Dout after padding -> agg-first path, ragged shapes exercise padding.
    run_case(B=2, N=40, Din=48, Dout=160)
    # Dout < Din, N_pad=256 -> two row tiles, exercises scratch hoist + reuse.
    run_case(B=2, N=136, Din=192, Dout=32)

    print("KERNEL_OK")
</pallas_src>

<mosaic_0001>
module attributes {stable_mosaic.version = 11 : i64} {
  func.func @_gcn_kernel_proj_first(%arg0: i32, %arg1: i32, %arg2: memref<1x128x128xf32, #tpu.memory_space<vmem>>, %arg3: memref<128x128xf32, #tpu.memory_space<vmem>>, %arg4: memref<1x128x128xf32, #tpu.memory_space<vmem>>, %arg5: memref<1x128x128xf32, #tpu.memory_space<vmem>>, %arg6: memref<128x128xf32, #tpu.memory_space<vmem>>) attributes {dimension_semantics = [#tpu.dimension_semantics<parallel>, #tpu.dimension_semantics<arbitrary>], iteration_bounds = array<i64: 2, 1>, scalar_prefetch = 0 : i64, scratch_operands = 1 : i64, tpu.core_type = #tpu.core_type<tc>, window_params = [{transform_indices = @transform_0, window_bounds = array<i64: 1, 128, 128>}, {pipeline_mode = #tpu.pipeline_mode<synchronous>, transform_indices = @transform_1, window_bounds = array<i64: 128, 128>}, {transform_indices = @transform_2, window_bounds = array<i64: 1, 128, 128>}, {transform_indices = @transform_3, window_bounds = array<i64: 1, 128, 128>}]} {
    %c0_i32 = arith.constant 0 : i32
    %0 = arith.cmpi eq, %arg1, %c0_i32 : i32
    %1 = arith.extui %0 : i1 to i32
    %c0_i32_0 = arith.constant 0 : i32
    %2 = arith.cmpi ne, %1, %c0_i32_0 : i32
    scf.if %2 {
      %c0_8 = arith.constant 0 : index
      %c0_9 = arith.constant 0 : index
      %c0_10 = arith.constant 0 : index
      %10 = vector.load %arg2[%c0_8, %c0_9, %c0_10] : memref<1x128x128xf32, #tpu.memory_space<vmem>>, vector<1x128x128xf32>
      %11 = vector.shape_cast %10 : vector<1x128x128xf32> to vector<128x128xf32>
      %c0_11 = arith.constant 0 : index
      %c0_12 = arith.constant 0 : index
      %12 = vector.load %arg3[%c0_11, %c0_12] : memref<128x128xf32, #tpu.memory_space<vmem>>, vector<128x128xf32>
      %cst_13 = arith.constant dense<0.000000e+00> : vector<128x128xf32>
      %13 = tpu.matmul %11, %12, %cst_13 {dimension_numbers = #tpu.dot_dimension_numbers<[1], [0], [0], [1], [0, 0, 1, 1], [], []>} : vector<128x128xf32>, vector<128x128xf32>, vector<128x128xf32> -> vector<128x128xf32>
      %c0_14 = arith.constant 0 : index
      %c0_15 = arith.constant 0 : index
      %14 = vector.load %arg6[%c0_14, %c0_15] : memref<128x128xf32, #tpu.memory_space<vmem>>, vector<128x128xf32>
      tpu.vector_store %arg6[%c0_14, %c0_15], %13 {strides = array<i32>} : memref<128x128xf32, #tpu.memory_space<vmem>>, vector<128x128xf32>,
    } else {
    }
    %c0 = arith.constant 0 : index
    %c0_1 = arith.constant 0 : index
    %c0_2 = arith.constant 0 : index
    %3 = vector.load %arg4[%c0, %c0_1, %c0_2] : memref<1x128x128xf32, #tpu.memory_space<vmem>>, vector<1x128x128xf32>
    %4 = vector.shape_cast %3 : vector<1x128x128xf32> to vector<128x128xf32>
    %c0_3 = arith.constant 0 : index
    %c0_4 = arith.constant 0 : index
    %5 = vector.load %arg6[%c0_3, %c0_4] : memref<128x128xf32, #tpu.memory_space<vmem>>, vector<128x128xf32>
    %cst = arith.constant dense<0.000000e+00> : vector<128x128xf32>
    %6 = tpu.matmul %4, %5, %cst {dimension_numbers = #tpu.dot_dimension_numbers<[1], [0], [0], [1], [0, 0, 1, 1], [], []>} : vector<128x128xf32>, vector<128x128xf32>, vector<128x128xf32> -> vector<128x128xf32>
    %c0_5 = arith.constant 0 : index
    %c0_6 = arith.constant 0 : index
    %c0_7 = arith.constant 0 : index
    %7 = vector.load %arg5[%c0_5, %c0_6, %c0_7] : memref<1x128x128xf32, #tpu.memory_space<vmem>>, vector<1x128x128xf32>
    %8 = vector.shape_cast %7 : vector<1x128x128xf32> to vector<128x128xf32>
    %9 = vector.shape_cast %6 : vector<128x128xf32> to vector<1x128x128xf32>
    tpu.vector_store %arg5[%c0_5, %c0_6, %c0_7], %9 {strides = array<i32>} : memref<1x128x128xf32, #tpu.memory_space<vmem>>, vector<1x128x128xf32>,
    return
  }
  func.func @transform_0(%arg0: i32, %arg1: i32) -> (i32, i32, i32) {
    %c0_i32 = arith.constant 0 : i32
    %c0_i32_0 = arith.constant 0 : i32
    %c0_i32_1 = arith.constant 0 : i32
    return %arg0, %c0_i32, %c0_i32_0 : i32, i32, i32
  }
  func.func @transform_1(%arg0: i32, %arg1: i32) -> (i32, i32) {
    %c0_i32 = arith.constant 0 : i32
    %c0_i32_0 = arith.constant 0 : i32
    %c0_i32_1 = arith.constant 0 : i32
    return %c0_i32, %c0_i32_0 : i32, i32
  }
  func.func @transform_2(%arg0: i32, %arg1: i32) -> (i32, i32, i32) {
    %c0_i32 = arith.constant 0 : i32
    %c0_i32_0 = arith.constant 0 : i32
    return %arg0, %arg1, %c0_i32 : i32, i32, i32
  }
  func.func @transform_3(%arg0: i32, %arg1: i32) -> (i32, i32, i32) {
    %c0_i32 = arith.constant 0 : i32
    %c0_i32_0 = arith.constant 0 : i32
    return %arg0, %arg1, %c0_i32 : i32, i32, i32
  }
}

</mosaic_0001>

<llo_original>
// kernel: tpu_custom_call.1
$region0: #{tpu_custom_call.1}
  #allocation0 [shape = 'u32[]', space=smem, size = 0x4, offset = 0x4, fixed_abs, tag = 'smem constant byte address 0x4 - core index']
  #allocation1 [shape = 'u32[144,128]{1,0:T(1,128)}', space=vmem, size = 0x12000, scoped, tag = 'internal scratch']
  #allocation2 [shape = 'f32[128,128]{1,0:T(8,128)}', space=vmem, size = 0x10000, scoped, tag = 'scratch operand']
  %s0 = inlined_call_operand.hbm [shape: f32[2,128,128], index: 0, kind: input, shape index: {}]
  %s1 = inlined_call_operand.hbm [shape: f32[128,128], index: 1, kind: input, shape index: {}]
  %s2 = inlined_call_operand.hbm [shape: f32[2,128,128], index: 2, kind: input, shape index: {}]
  %s3 = inlined_call_operand.hbm [shape: f32[2,128,128], index: 3, kind: output, shape index: {}]
  %s4 = sld [smem:[#allocation0]]
  $region61: #{tpu_custom_call.1} parent=0
    _
  %s6 = ssub.s32 1, %s4
  %s7 = scalar_select 0, %s6, %s4
  $region1: #{tpu_custom_call.1} parent=0
    #allocation3 [shape = 'u8[131072]{0}', space=vmem, size = 0x20000, scoped, tag = 'input window, operand 0']
    #allocation4 [shape = 's32[2]{0}', space=sflag, size = 0x8, scoped, tag = 'scoped memory for tpu_custom_call.1']
    #allocation5 [shape = 's32[2]{0}', space=sflag, size = 0x8, scoped, tag = 'scoped memory for tpu_custom_call.1']
    #allocation6 [shape = 'u8[65536]{0}', space=vmem, size = 0x10000, scoped, tag = 'input window, operand 1, single buffered']
    #allocation7 [shape = 's32[1]{0}', space=sflag, size = 0x4, scoped, tag = 'scoped memory for tpu_custom_call.1']
    #allocation8 [shape = 'u8[131072]{0}', space=vmem, size = 0x20000, scoped, tag = 'input window, operand 2']
    #allocation9 [shape = 'u8[131072]{0}', space=vmem, size = 0x20000, scoped, tag = 'output window, operand 0']
    %8 = vsyncpa [#allocation4], 0
    %s9 = scalar_lea.sflag [#allocation4], 1
    %10 = vsyncpa %s9, 0
    %11 = vsyncpa [#allocation7], 0
    %12 = vsyncpa [#allocation5], 0
    %s13 = scalar_lea.sflag [#allocation5], 1
    %14 = vsyncpa %s13, 0
    loop: start=0, step=1, limit=4
    $region2: #{tpu_custom_call.1} parent=1 // loop_pre_header
      _
    $region3: #{tpu_custom_call.1} parent=1 // loop_header
      %s16 = sphi 0, %s20
      %p17 = scmp.ge.s32.totalorder %s16, 4
      %s23 = sphi 0, %s35
      %s24 = sphi 0, %s31
      %s25 = sphi 0, %s23
      %s26 = sphi 0, %s24
      %s27 = sphi 0, %s25
      %s28 = sphi 0, %s26
      %s38 = sphi 0, %s40
      %s41 = sphi 0, %s38
      %s42 = sphi 0, %s41
      %s58 = sphi 0, %s42
      %s62 = sphi 0, %s62
      %s64 = sphi 0, %s62
      %s65 = sphi 0, %s64
      %s79 = sphi 0, %s65
      %s87 = sphi 0, %s89
      %s90 = sphi 0, %s87
      %s91 = sphi 0, %s90
      %s107 = sphi 0, %s91
      %s115 = sphi 0, %s117
      %s118 = sphi 0, %s115
      %s119 = sphi 0, %s118
      %s135 = sphi 0, %s119
    $region4: #{tpu_custom_call.1} parent=1 // loop_header_branch
      %19 = sbr.rel (%p17) target = $region8
    $region5: #{tpu_custom_call.1} parent=1 // loop_body
      %s21 = ssub.s32 %s16, 1
      %s22 = ssub.s32 %s16, 2
      %s29 = sadd.s32 1, %s24
      %p30 = scmp.ge.s32.totalorder %s29, 1
      %s31 = scalar_select %p30, 0, %s29
      %s32 = sadd.s32 1, %s23
      %s33 = scalar_select %p30, %s32, %s23
      %p34 = scmp.ge.s32.totalorder %s33, 2
      %s35 = scalar_select %p34, 0, %s33
      %s36 = ssub.s32 %s23, %s35
      %p37 = scmp.eq.s32.totalorder %s36, 0
      %s39 = sadd.s32 %s38, 1
      %s40 = scalar_select %p37, %s38, %s39
      %p43 = pneg %p37
      %p44 = scmp.eq.s32.totalorder %s16, 1
      %p45 = por %p43, %p44
      %p46 = scmp.ne.s32.totalorder %s38, %s41
      %p47 = scmp.eq.s32.totalorder %s16, 0
      %p48 = por %p46, %p47
      %p49 = scmp.ne.s32.totalorder %s38, %s41
      %p50 = scmp.eq.s32.totalorder %s21, 1
      %p51 = por %p49, %p50
      %p52 = scmp.ne.s32.totalorder %s41, %s42
      %p53 = scmp.eq.s32.totalorder %s21, 0
      %p54 = por %p52, %p53
      %p55 = scmp.ne.s32.totalorder %s41, %s42
      %p56 = scmp.eq.s32.totalorder %s22, 1
      %p57 = por %p55, %p56
      %p59 = scmp.ne.s32.totalorder %s42, %s58
      %p60 = scmp.eq.s32.totalorder %s22, 0
      %p61 = por %p59, %p60
      %s63 = sadd.s32 %s62, 1
      %p66 = scmp.eq.s32.totalorder %s16, 1
      %p67 = scmp.ne.s32.totalorder %s62, %s64
      %p68 = scmp.eq.s32.totalorder %s16, 0
      %p69 = por %p67, %p68
      %p70 = scmp.ne.s32.totalorder %s62, %s64
      %p71 = scmp.eq.s32.totalorder %s21, 1
      %p72 = por %p70, %p71
      %p73 = scmp.ne.s32.totalorder %s64, %s65
      %p74 = scmp.eq.s32.totalorder %s21, 0
      %p75 = por %p73, %p74
      %p76 = scmp.ne.s32.totalorder %s64, %s65
      %p77 = scmp.eq.s32.totalorder %s22, 1
      %p78 = por %p76, %p77
      %p80 = scmp.ne.s32.totalorder %s65, %s79
      %p81 = scmp.eq.s32.totalorder %s22, 0
      %p82 = por %p80, %p81
      %s83 = ssub.s32 %s23, %s35
      %s84 = ssub.s32 %s24, %s31
      %s85 = sor.u32 %s83, %s84
      %p86 = scmp.eq.s32.totalorder %s85, 0
      %s88 = sadd.s32 %s87, 1
      %s89 = scalar_select %p86, %s87, %s88
      %p92 = pneg %p86
      %p93 = scmp.eq.s32.totalorder %s16, 1
      %p94 = por %p92, %p93
      %p95 = scmp.ne.s32.totalorder %s87, %s90
      %p96 = scmp.eq.s32.totalorder %s16, 0
      %p97 = por %p95, %p96
      %p98 = scmp.ne.s32.totalorder %s87, %s90
      %p99 = scmp.eq.s32.totalorder %s21, 1
      %p100 = por %p98, %p99
      %p101 = scmp.ne.s32.totalorder %s90, %s91
      %p102 = scmp.eq.s32.totalorder %s21, 0
      %p103 = por %p101, %p102
      %p104 = scmp.ne.s32.totalorder %s90, %s91
      %p105 = scmp.eq.s32.totalorder %s22, 1
      %p106 = por %p104, %p105
      %p108 = scmp.ne.s32.totalorder %s91, %s107
      %p109 = scmp.eq.s32.totalorder %s22, 0
      %p110 = por %p108, %p109
      %s111 = ssub.s32 %s23, %s35
      %s112 = ssub.s32 %s24, %s31
      %s113 = sor.u32 %s111, %s112
      %p114 = scmp.eq.s32.totalorder %s113, 0
      %s116 = sadd.s32 %s115, 1
      %s117 = scalar_select %p114, %s115, %s116
      %p120 = pneg %p114
      %p121 = scmp.eq.s32.totalorder %s16, 1
      %p122 = por %p120, %p121
      %p123 = scmp.ne.s32.totalorder %s115, %s118
      %p124 = scmp.eq.s32.totalorder %s16, 0
      %p125 = por %p123, %p124
      %p126 = scmp.ne.s32.totalorder %s115, %s118
      %p127 = scmp.eq.s32.totalorder %s21, 1
      %p128 = por %p126, %p127
      %p129 = scmp.ne.s32.totalorder %s118, %s119
      %p130 = scmp.eq.s32.totalorder %s21, 0
      %p131 = por %p129, %p130
      %p132 = scmp.ne.s32.totalorder %s118, %s119
      %p133 = scmp.eq.s32.totalorder %s22, 1
      %p134 = por %p132, %p133
      %p136 = scmp.ne.s32.totalorder %s119, %s135
      %p137 = scmp.eq.s32.totalorder %s22, 0
      %p138 = por %p136, %p137
      %p139 = scmp.le.s32.totalorder 1, %s16
      %p140 = scmp.lt.s32.totalorder %s16, 3
      %p141 = pnand %p139, %p140
      %p142 = pneg %p141
      // Predicated region
      $region9: #{tpu_custom_call.1} parent=5 // pred_check
        _
      $region10: #{tpu_custom_call.1} parent=5 // pred_check_branch
        %144 = sbr.rel (%p141) target = $region12
      $region11: #{tpu_custom_call.1} parent=5 // pred_region
        %s145 = ssub.s32 %s16, 1
        // Predicated region
        $region13: #{tpu_custom_call.1} parent=11 // pred_check
          %p146 = pneg %p75
        $region14: #{tpu_custom_call.1} parent=11 // pred_check_branch
          %148 = sbr.rel (%p146) target = $region16
        $region15: #{tpu_custom_call.1} parent=11 // pred_region
          %s150 = ssub.s32 2048, 2048
          %151 = vsyncadd [#allocation7], %s150
          %s152 = sshll.u32 [#allocation6], 4
          %s153 = int_to_ptr.vmem [resolvable:$true] %s152
          %158 = dma.hbm_to_vmem [thread:$0]  %s1, 2048, %s153, [#allocation7], 128, 128, 8
        $region16: #{tpu_custom_call.1} parent=11 // pred_fallthru
          _
      $region12: #{tpu_custom_call.1} parent=5 // pred_fallthru
        _
      %p159 = scmp.lt.s32.totalorder %s16, 2
      // Predicated region
      $region17: #{tpu_custom_call.1} parent=5 // pred_check
        %p160 = pneg %p159
      $region18: #{tpu_custom_call.1} parent=5 // pred_check_branch
        %162 = sbr.rel (%p160) target = $region20
      $region19: #{tpu_custom_call.1} parent=5 // pred_region
        // Predicated region
        $region21: #{tpu_custom_call.1} parent=19 // pred_check
          %p163 = pneg %p48
        $region22: #{tpu_custom_call.1} parent=19 // pred_check_branch
          %165 = sbr.rel (%p163) target = $region24
        $region23: #{tpu_custom_call.1} parent=19 // pred_region
          %s166 = sand.u32 %s16, 1
          %s167 = scalar_lea.sflag [#allocation4], %s166
          %s168 = sand.u32 %s38, 1
          %s169 = smul.addr %s168, 128
          %s170 = scalar_lea.vmem [#allocation3], %s169
          %s172 = ssub.s32 2048, 2048
          %173 = vsyncadd %s167, %s172
          %s174 = smul.addr %s23, 16
          %s175 = smul.addr %s174, 128
          %s176 = scalar_lea.hbm %s0, %s175
          %s177 = sshll.u32 %s170, 4
          %s178 = int_to_ptr.vmem [resolvable:$true] %s177
          %183 = dma.hbm_to_vmem [thread:$0]  %s176, 2048, %s178, %s167, 128, 128, 8
        $region24: #{tpu_custom_call.1} parent=19 // pred_fallthru
          _
        // Predicated region
        $region25: #{tpu_custom_call.1} parent=19 // pred_check
          %p184 = pneg %p97
        $region26: #{tpu_custom_call.1} parent=19 // pred_check_branch
          %186 = sbr.rel (%p184) target = $region28
        $region27: #{tpu_custom_call.1} parent=19 // pred_region
          %s187 = sand.u32 %s16, 1
          %s188 = scalar_lea.sflag [#allocation4], %s187
          %s189 = sand.u32 %s87, 1
          %s190 = smul.addr %s189, 128
          %s191 = scalar_lea.vmem [#allocation8], %s190
          %s192 = smul.u32 16, %s24
          %s194 = ssub.s32 2048, 2048
          %195 = vsyncadd %s188, %s194
          %s196 = smul.addr %s23, 16
          %s197 = sadd.s32 %s192, %s196
          %s198 = smul.addr %s197, 128
          %s199 = scalar_lea.hbm %s2, %s198
          %s200 = sshll.u32 %s191, 4
          %s201 = int_to_ptr.vmem [resolvable:$true] %s200
          %206 = dma.hbm_to_vmem [thread:$0]  %s199, 2048, %s201, %s188, 128, 128, 8
        $region28: #{tpu_custom_call.1} parent=19 // pred_fallthru
          _
      $region20: #{tpu_custom_call.1} parent=5 // pred_fallthru
        _
      %p207 = scmp.le.s32.totalorder 1, %s16
      %p208 = scmp.lt.s32.totalorder %s16, 3
      %p209 = pnand %p207, %p208
      %p210 = pneg %p209
      // Predicated region
      $region29: #{tpu_custom_call.1} parent=5 // pred_check
        _
      $region30: #{tpu_custom_call.1} parent=5 // pred_check_branch
        %212 = sbr.rel (%p209) target = $region32
      $region31: #{tpu_custom_call.1} parent=5 // pred_region
        %s213 = ssub.s32 %s16, 1
        %s214 = sand.u32 %s21, 1
        %s215 = scalar_lea.sflag [#allocation4], %s214
        %s216 = sand.u32 %s41, 1
        %s217 = smul.addr %s216, 128
        %s218 = scalar_lea.vmem [#allocation3], %s217
        // Predicated region
        $region33: #{tpu_custom_call.1} parent=31 // pred_check
          %p219 = pneg %p54
        $region34: #{tpu_custom_call.1} parent=31 // pred_check_branch
          %221 = sbr.rel (%p219) target = $region36
        $region35: #{tpu_custom_call.1} parent=31 // pred_region
          %222 = dma.done %s215, 2048
        $region36: #{tpu_custom_call.1} parent=31 // pred_fallthru
          _
        // Predicated region
        $region37: #{tpu_custom_call.1} parent=31 // pred_check
          %p223 = pneg %p75
        $region38: #{tpu_custom_call.1} parent=31 // pred_check_branch
          %225 = sbr.rel (%p223) target = $region40
        $region39: #{tpu_custom_call.1} parent=31 // pred_region
          %226 = dma.done [#allocation7], 2048
        $region40: #{tpu_custom_call.1} parent=31 // pred_fallthru
          _
        %s227 = sand.u32 %s21, 1
        %s228 = scalar_lea.sflag [#allocation4], %s227
        %s229 = sand.u32 %s90, 1
        %s230 = smul.addr %s229, 128
        %s231 = scalar_lea.vmem [#allocation8], %s230
        // Predicated region
        $region41: #{tpu_custom_call.1} parent=31 // pred_check
          %p232 = pneg %p103
        $region42: #{tpu_custom_call.1} parent=31 // pred_check_branch
          %234 = sbr.rel (%p232) target = $region44
        $region43: #{tpu_custom_call.1} parent=31 // pred_region
          %235 = dma.done %s228, 2048
        $region44: #{tpu_custom_call.1} parent=31 // pred_fallthru
          _
        %s236 = sand.u32 %s21, 1
        %s237 = scalar_lea.sflag [#allocation4], %s236
        %s238 = sand.u32 %s41, 1
        %s239 = smul.addr %s238, 128
        %s240 = scalar_lea.vmem [#allocation3], %s239
        %p241 = pneg %p54
        %p242 = pneg %p51
        %p243 = pneg %p75
        %p244 = pneg %p72
        %s245 = sand.u32 %s21, 1
        %s246 = scalar_lea.sflag [#allocation4], %s245
        %s247 = sand.u32 %s90, 1
        %s248 = smul.addr %s247, 128
        %s249 = scalar_lea.vmem [#allocation8], %s248
        %p250 = pneg %p103
        %p251 = pneg %p100
        %p252 = pneg %p131
        %p253 = pneg %p128
        %s254 = sand.u32 %s118, 1
        %s255 = scalar_lea.sflag [#allocation5], %s254
        %s256 = sand.u32 %s118, 1
        %s257 = smul.addr %s256, 128
        %s258 = scalar_lea.vmem [#allocation9], %s257
        %s259 = smul.u32 16, %s26
        %s260 = smul.u32 16, %s26
        %p261 = scmp.eq.s32.totalorder %s26, 0
        // Predicated region
        $region45: #{tpu_custom_call.1} parent=31 // pred_check
          %p262 = pneg %p261
        $region46: #{tpu_custom_call.1} parent=31 // pred_check_branch
          %264 = sbr.rel (%p262) target = $region48
        $region47: #{tpu_custom_call.1} parent=31 // pred_region
          %v265 = vld [vmem:[%s218] sm:$0xff]
          %v266 = vld [vmem:[%s218 + $0x8] sm:$0xff]
          %v267 = vld [vmem:[%s218 + $0x10] sm:$0xff]
          %v268 = vld [vmem:[%s218 + $0x18] sm:$0xff]
          %v269 = vld [vmem:[%s218 + $0x20] sm:$0xff]
          %v270 = vld [vmem:[%s218 + $0x28] sm:$0xff]
          %v271 = vld [vmem:[%s218 + $0x30] sm:$0xff]
          %v272 = vld [vmem:[%s218 + $0x38] sm:$0xff]
          %v273 = vld [vmem:[%s218 + $0x40] sm:$0xff]
          %v274 = vld [vmem:[%s218 + $0x48] sm:$0xff]
          %v275 = vld [vmem:[%s218 + $0x50] sm:$0xff]
          %v276 = vld [vmem:[%s218 + $0x58] sm:$0xff]
          %v277 = vld [vmem:[%s218 + $0x60] sm:$0xff]
          %v278 = vld [vmem:[%s218 + $0x68] sm:$0xff]
          %v279 = vld [vmem:[%s218 + $0x70] sm:$0xff]
          %v280 = vld [vmem:[%s218 + $0x78] sm:$0xff]
          %v281 = vld [vmem:[#allocation6] sm:$0xff]
          %v282 = vld [vmem:[#allocation6 + $0x8] sm:$0xff]
          %v283 = vld [vmem:[#allocation6 + $0x10] sm:$0xff]
          %v284 = vld [vmem:[#allocation6 + $0x18] sm:$0xff]
          %v285 = vld [vmem:[#allocation6 + $0x20] sm:$0xff]
          %v286 = vld [vmem:[#allocation6 + $0x28] sm:$0xff]
          %v287 = vld [vmem:[#allocation6 + $0x30] sm:$0xff]
          %v288 = vld [vmem:[#allocation6 + $0x38] sm:$0xff]
          %v289 = vld [vmem:[#allocation6 + $0x40] sm:$0xff]
          %v290 = vld [vmem:[#allocation6 + $0x48] sm:$0xff]
          %v291 = vld [vmem:[#allocation6 + $0x50] sm:$0xff]
          %v292 = vld [vmem:[#allocation6 + $0x58] sm:$0xff]
          %v293 = vld [vmem:[#allocation6 + $0x60] sm:$0xff]
          %v294 = vld [vmem:[#allocation6 + $0x68] sm:$0xff]
          %v295 = vld [vmem:[#allocation6 + $0x70] sm:$0xff]
          %v296 = vld [vmem:[#allocation6 + $0x78] sm:$0xff]
          %297 = vmatprep.subr.mxu0 0.0
          %298 = vmatpush1.msra.mxu0 %v281
          %299 = vmatprep.subr.mxu0 0.0
          %300 = vmatpush1.msra.mxu0 %v282
          %301 = vmatprep.subr.mxu0 0.0
          %302 = vmatpush1.msra.mxu0 %v283
          %303 = vmatprep.subr.mxu0 0.0
          %304 = vmatpush1.msra.mxu0 %v284
          %305 = vmatprep.subr.mxu0 0.0
          %306 = vmatpush1.msra.mxu0 %v285
          %307 = vmatprep.subr.mxu0 0.0
          %308 = vmatpush1.msra.mxu0 %v286
          %309 = vmatprep.subr.mxu0 0.0
          %310 = vmatpush1.msra.mxu0 %v287
          %311 = vmatprep.subr.mxu0 0.0
          %312 = vmatpush1.msra.mxu0 %v288
          %313 = vmatprep.subr.mxu0 0.0
          %314 = vmatpush1.msra.mxu0 %v289
          %315 = vmatprep.subr.mxu0 0.0
          %316 = vmatpush1.msra.mxu0 %v290
          %317 = vmatprep.subr.mxu0 0.0
          %318 = vmatpush1.msra.mxu0 %v291
          %319 = vmatprep.subr.mxu0 0.0
          %320 = vmatpush1.msra.mxu0 %v292
          %321 = vmatprep.subr.mxu0 0.0
          %322 = vmatpush1.msra.mxu0 %v293
          %323 = vmatprep.subr.mxu0 0.0
          %324 = vmatpush1.msra.mxu0 %v294
          %325 = vmatprep.subr.mxu0 0.0
          %326 = vmatpush1.msra.mxu0 %v295
          %327 = vmatprep.subr.mxu0 0.0
          %328 = vmatpush1.msra.mxu0 %v296
          %329 = vmatprep.subr.mxu0 0.0
          %330 = vmatpush1.msra.mxu0 0.0
          %331 = vmatprep.subr.mxu0 0.0
          %332 = vmatpush1.msra.mxu0 0.0
          %333 = vmatprep.subr.mxu0 0.0
          %334 = vmatpush1.msra.mxu0 0.0
          %335 = vmatprep.subr.mxu0 0.0
          %336 = vmatpush1.msra.mxu0 0.0
          %337 = vmatprep.subr.mxu0 0.0
          %338 = vmatpush1.msra.mxu0 0.0
          %339 = vmatprep.subr.mxu0 0.0
          %340 = vmatpush1.msra.mxu0 0.0
          %341 = vmatprep.subr.mxu0 0.0
          %342 = vmatpush1.msra.mxu0 0.0
          %343 = vmatprep.subr.mxu0 0.0
          %344 = vmatpush1.msra.mxu0 0.0
          %345 = vmatprep.subr.mxu0 0.0
          %346 = vmatpush1.msra.mxu0 0.0
          %347 = vmatprep.subr.mxu0 0.0
          %348 = vmatpush1.msra.mxu0 0.0
          %349 = vmatprep.subr.mxu0 0.0
          %350 = vmatpush1.msra.mxu0 0.0
          %351 = vmatprep.subr.mxu0 0.0
          %352 = vmatpush1.msra.mxu0 0.0
          %353 = vmatprep.subr.mxu0 0.0
          %354 = vmatpush1.msra.mxu0 0.0
          %355 = vmatprep.subr.mxu0 0.0
          %356 = vmatpush1.msra.mxu0 0.0
          %357 = vmatprep.subr.mxu0 0.0
          %358 = vmatpush1.msra.mxu0 0.0
          %359 = vmatprep.subr.mxu0 0.0
          %360 = vmatpush1.msra.mxu0 0.0
          %361 = vmatprep.mubr.f32.mxu0 0.0
          %362 = vmatmul.mubr.f32.gmra.mrb[0].mxu0 %v265
          %v363 = vpop.f32.mrb[0].mxu0
          %v364 = vadd.f32 0.0, %v363
          %v365 = vpop.f32.mrb[0].mxu0
          %366 = vmatprep.mubr.f32.mxu0 0.0
          %367 = vmatmul.mubr.f32.gmra.mrb[0].mxu0 %v266
          %v368 = vpop.f32.mrb[0].mxu0
          %v369 = vadd.f32 0.0, %v368
          %v370 = vpop.f32.mrb[0].mxu0
          %371 = vmatprep.mubr.f32.mxu0 0.0
          %372 = vmatmul.mubr.f32.gmra.mrb[0].mxu0 %v267
          %v373 = vpop.f32.mrb[0].mxu0
          %v374 = vadd.f32 0.0, %v373
          %v375 = vpop.f32.mrb[0].mxu0
          %376 = vmatprep.mubr.f32.mxu0 0.0
          %377 = vmatmul.mubr.f32.gmra.mrb[0].mxu0 %v268
          %v378 = vpop.f32.mrb[0].mxu0
          %v379 = vadd.f32 0.0, %v378
          %v380 = vpop.f32.mrb[0].mxu0
          %381 = vmatprep.mubr.f32.mxu0 0.0
          %382 = vmatmul.mubr.f32.gmra.mrb[0].mxu0 %v269
          %v383 = vpop.f32.mrb[0].mxu0
          %v384 = vadd.f32 0.0, %v383
          %v385 = vpop.f32.mrb[0].mxu0
          %386 = vmatprep.mubr.f32.mxu0 0.0
          %387 = vmatmul.mubr.f32.gmra.mrb[0].mxu0 %v270
          %v388 = vpop.f32.mrb[0].mxu0
          %v389 = vadd.f32 0.0, %v388
          %v390 = vpop.f32.mrb[0].mxu0
          %391 = vmatprep.mubr.f32.mxu0 0.0
          %392 = vmatmul.mubr.f32.gmra.mrb[0].mxu0 %v271
          %v393 = vpop.f32.mrb[0].mxu0
          %v394 = vadd.f32 0.0, %v393
          %v395 = vpop.f32.mrb[0].mxu0
          %396 = vmatprep.mubr.f32.mxu0 0.0
          %397 = vmatmul.mubr.f32.gmra.mrb[0].mxu0 %v272
          %v398 = vpop.f32.mrb[0].mxu0
          %v399 = vadd.f32 0.0, %v398
          %v400 = vpop.f32.mrb[0].mxu0
          %401 = vmatprep.mubr.f32.mxu0 0.0
          %402 = vmatmul.mubr.f32.gmra.mrb[0].mxu0 %v273
          %v403 = vpop.f32.mrb[0].mxu0
          %v404 = vadd.f32 0.0, %v403
          %v405 = vpop.f32.mrb[0].mxu0
          %406 = vmatprep.mubr.f32.mxu0 0.0
          %407 = vmatmul.mubr.f32.gmra.mrb[0].mxu0 %v274
          %v408 = vpop.f32.mrb[0].mxu0
          %v409 = vadd.f32 0.0, %v408
          %v410 = vpop.f32.mrb[0].mxu0
          %411 = vmatprep.mubr.f32.mxu0 0.0
          %412 = vmatmul.mubr.f32.gmra.mrb[0].mxu0 %v275
          %v413 = vpop.f32.mrb[0].mxu0
          %v414 = vadd.f32 0.0, %v413
          %v415 = vpop.f32.mrb[0].mxu0
          %416 = vmatprep.mubr.f32.mxu0 0.0
          %417 = vmatmul.mubr.f32.gmra.mrb[0].mxu0 %v276
          %v418 = vpop.f32.mrb[0].mxu0
          %v419 = vadd.f32 0.0, %v418
          %v420 = vpop.f32.mrb[0].mxu0
          %421 = vmatprep.mubr.f32.mxu0 0.0
          %422 = vmatmul.mubr.f32.gmra.mrb[0].mxu0 %v277
          %v423 = vpop.f32.mrb[0].mxu0
          %v424 = vadd.f32 0.0, %v423
          %v425 = vpop.f32.mrb[0].mxu0
          %426 = vmatprep.mubr.f32.mxu0 0.0
          %427 = vmatmul.mubr.f32.gmra.mrb[0].mxu0 %v278
          %v428 = vpop.f32.mrb[0].mxu0
          %v429 = vadd.f32 0.0, %v428
          %v430 = vpop.f32.mrb[0].mxu0
          %431 = vmatprep.mubr.f32.mxu0 0.0
          %432 = vmatmul.mubr.f32.gmra.mrb[0].mxu0 %v279
          %v433 = vpop.f32.mrb[0].mxu0
          %v434 = vadd.f32 0.0, %v433
          %v435 = vpop.f32.mrb[0].mxu0
          %436 = vmatprep.mubr.f32.mxu0 0.0
          %437 = vmatmul.mubr.f32.gmra.mrb[0].mxu0 %v280
          %v438 = vpop.f32.mrb[0].mxu0
          %v439 = vadd.f32 0.0, %v438
          %v440 = vpop.f32.mrb[0].mxu0
          %441 = vdwg.mxu0
          %442 = vst [vmem:[#allocation2] sm:$0xff] %v364
          %443 = vst [vmem:[#allocation2 + $0x8] sm:$0xff] %v369
          %444 = vst [vmem:[#allocation2 + $0x10] sm:$0xff] %v374
          %445 = vst [vmem:[#allocation2 + $0x18] sm:$0xff] %v379
          %446 = vst [vmem:[#allocation2 + $0x20] sm:$0xff] %v384
          %447 = vst [vmem:[#allocation2 + $0x28] sm:$0xff] %v389
          %448 = vst [vmem:[#allocation2 + $0x30] sm:$0xff] %v394
          %449 = vst [vmem:[#allocation2 + $0x38] sm:$0xff] %v399
          %450 = vst [vmem:[#allocation2 + $0x40] sm:$0xff] %v404
          %451 = vst [vmem:[#allocation2 + $0x48] sm:$0xff] %v409
          %452 = vst [vmem:[#allocation2 + $0x50] sm:$0xff] %v414
          %453 = vst [vmem:[#allocation2 + $0x58] sm:$0xff] %v419
          %454 = vst [vmem:[#allocation2 + $0x60] sm:$0xff] %v424
          %455 = vst [vmem:[#allocation2 + $0x68] sm:$0xff] %v429
          %456 = vst [vmem:[#allocation2 + $0x70] sm:$0xff] %v434
          %457 = vst [vmem:[#allocation2 + $0x78] sm:$0xff] %v439
        $region48: #{tpu_custom_call.1} parent=31 // pred_fallthru
          _
        %v458 = vld [vmem:[%s231] sm:$0xff]
        %v459 = vld [vmem:[%s231 + $0x8] sm:$0xff]
        %v460 = vld [vmem:[%s231 + $0x10] sm:$0xff]
        %v461 = vld [vmem:[%s231 + $0x18] sm:$0xff]
        %v462 = vld [vmem:[%s231 + $0x20] sm:$0xff]
        %v463 = vld [vmem:[%s231 + $0x28] sm:$0xff]
        %v464 = vld [vmem:[%s231 + $0x30] sm:$0xff]
        %v465 = vld [vmem:[%s231 + $0x38] sm:$0xff]
        %v466 = vld [vmem:[%s231 + $0x40] sm:$0xff]
        %v467 = vld [vmem:[%s231 + $0x48] sm:$0xff]
        %v468 = vld [vmem:[%s231 + $0x50] sm:$0xff]
        %v469 = vld [vmem:[%s231 + $0x58] sm:$0xff]
        %v470 = vld [vmem:[%s231 + $0x60] sm:$0xff]
        %v471 = vld [vmem:[%s231 + $0x68] sm:$0xff]
        %v472 = vld [vmem:[%s231 + $0x70] sm:$0xff]
        %v473 = vld [vmem:[%s231 + $0x78] sm:$0xff]
        %v474 = vld [vmem:[#allocation2] sm:$0xff]
        %v475 = vld [vmem:[#allocation2 + $0x8] sm:$0xff]
        %v476 = vld [vmem:[#allocation2 + $0x10] sm:$0xff]
        %v477 = vld [vmem:[#allocation2 + $0x18] sm:$0xff]
        %v478 = vld [vmem:[#allocation2 + $0x20] sm:$0xff]
        %v479 = vld [vmem:[#allocation2 + $0x28] sm:$0xff]
        %v480 = vld [vmem:[#allocation2 + $0x30] sm:$0xff]
        %v481 = vld [vmem:[#allocation2 + $0x38] sm:$0xff]
        %v482 = vld [vmem:[#allocation2 + $0x40] sm:$0xff]
        %v483 = vld [vmem:[#allocation2 + $0x48] sm:$0xff]
        %v484 = vld [vmem:[#allocation2 + $0x50] sm:$0xff]
        %v485 = vld [vmem:[#allocation2 + $0x58] sm:$0xff]
        %v486 = vld [vmem:[#allocation2 + $0x60] sm:$0xff]
        %v487 = vld [vmem:[#allocation2 + $0x68] sm:$0xff]
        %v488 = vld [vmem:[#allocation2 + $0x70] sm:$0xff]
        %v489 = vld [vmem:[#allocation2 + $0x78] sm:$0xff]
        %490 = vmatprep.subr.mxu0 0.0
        %491 = vmatpush1.msra.mxu0 %v474
        %492 = vmatprep.subr.mxu0 0.0
        %493 = vmatpush1.msra.mxu0 %v475
        %494 = vmatprep.subr.mxu0 0.0
        %495 = vmatpush1.msra.mxu0 %v476
        %496 = vmatprep.subr.mxu0 0.0
        %497 = vmatpush1.msra.mxu0 %v477
        %498 = vmatprep.subr.mxu0 0.0
        %499 = vmatpush1.msra.mxu0 %v478
        %500 = vmatprep.subr.mxu0 0.0
        %501 = vmatpush1.msra.mxu0 %v479
        %502 = vmatprep.subr.mxu0 0.0
        %503 = vmatpush1.msra.mxu0 %v480
        %504 = vmatprep.subr.mxu0 0.0
        %505 = vmatpush1.msra.mxu0 %v481
        %506 = vmatprep.subr.mxu0 0.0
        %507 = vmatpush1.msra.mxu0 %v482
        %508 = vmatprep.subr.mxu0 0.0
        %509 = vmatpush1.msra.mxu0 %v483
        %510 = vmatprep.subr.mxu0 0.0
        %511 = vmatpush1.msra.mxu0 %v484
        %512 = vmatprep.subr.mxu0 0.0
        %513 = vmatpush1.msra.mxu0 %v485
        %514 = vmatprep.subr.mxu0 0.0
        %515 = vmatpush1.msra.mxu0 %v486
        %516 = vmatprep.subr.mxu0 0.0
        %517 = vmatpush1.msra.mxu0 %v487
        %518 = vmatprep.subr.mxu0 0.0
        %519 = vmatpush1.msra.mxu0 %v488
        %520 = vmatprep.subr.mxu0 0.0
        %521 = vmatpush1.msra.mxu0 %v489
        %522 = vmatprep.subr.mxu0 0.0
        %523 = vmatpush1.msra.mxu0 0.0
        %524 = vmatprep.subr.mxu0 0.0
        %525 = vmatpush1.msra.mxu0 0.0
        %526 = vmatprep.subr.mxu0 0.0
        %527 = vmatpush1.msra.mxu0 0.0
        %528 = vmatprep.subr.mxu0 0.0
        %529 = vmatpush1.msra.mxu0 0.0
        %530 = vmatprep.subr.mxu0 0.0
        %531 = vmatpush1.msra.mxu0 0.0
        %532 = vmatprep.subr.mxu0 0.0
        %533 = vmatpush1.msra.mxu0 0.0
        %534 = vmatprep.subr.mxu0 0.0
        %535 = vmatpush1.msra.mxu0 0.0
        %536 = vmatprep.subr.mxu0 0.0
        %537 = vmatpush1.msra.mxu0 0.0
        %538 = vmatprep.subr.mxu0 0.0
        %539 = vmatpush1.msra.mxu0 0.0
        %540 = vmatprep.subr.mxu0 0.0
        %541 = vmatpush1.msra.mxu0 0.0
        %542 = vmatprep.subr.mxu0 0.0
        %543 = vmatpush1.msra.mxu0 0.0
        %544 = vmatprep.subr.mxu0 0.0
        %545 = vmatpush1.msra.mxu0 0.0
        %546 = vmatprep.subr.mxu0 0.0
        %547 = vmatpush1.msra.mxu0 0.0
        %548 = vmatprep.subr.mxu0 0.0
        %549 = vmatpush1.msra.mxu0 0.0
        %550 = vmatprep.subr.mxu0 0.0
        %551 = vmatpush1.msra.mxu0 0.0
        %552 = vmatprep.subr.mxu0 0.0
        %553 = vmatpush1.msra.mxu0 0.0
        %554 = vmatprep.mubr.f32.mxu0 0.0
        %555 = vmatmul.mubr.f32.gmra.mrb[0].mxu0 %v458
        %v556 = vpop.f32.mrb[0].mxu0
        %v557 = vadd.f32 0.0, %v556
        %v558 = vpop.f32.mrb[0].mxu0
        %559 = vmatprep.mubr.f32.mxu0 0.0
        %560 = vmatmul.mubr.f32.gmra.mrb[0].mxu0 %v459
        %v561 = vpop.f32.mrb[0].mxu0
        %v562 = vadd.f32 0.0, %v561
        %v563 = vpop.f32.mrb[0].mxu0
        %564 = vmatprep.mubr.f32.mxu0 0.0
        %565 = vmatmul.mubr.f32.gmra.mrb[0].mxu0 %v460
        %v566 = vpop.f32.mrb[0].mxu0
        %v567 = vadd.f32 0.0, %v566
        %v568 = vpop.f32.mrb[0].mxu0
        %569 = vmatprep.mubr.f32.mxu0 0.0
        %570 = vmatmul.mubr.f32.gmra.mrb[0].mxu0 %v461
        %v571 = vpop.f32.mrb[0].mxu0
        %v572 = vadd.f32 0.0, %v571
        %v573 = vpop.f32.mrb[0].mxu0
        %574 = vmatprep.mubr.f32.mxu0 0.0
        %575 = vmatmul.mubr.f32.gmra.mrb[0].mxu0 %v462
        %v576 = vpop.f32.mrb[0].mxu0
        %v577 = vadd.f32 0.0, %v576
        %v578 = vpop.f32.mrb[0].mxu0
        %579 = vmatprep.mubr.f32.mxu0 0.0
        %580 = vmatmul.mubr.f32.gmra.mrb[0].mxu0 %v463
        %v581 = vpop.f32.mrb[0].mxu0
        %v582 = vadd.f32 0.0, %v581
        %v583 = vpop.f32.mrb[0].mxu0
        %584 = vmatprep.mubr.f32.mxu0 0.0
        %585 = vmatmul.mubr.f32.gmra.mrb[0].mxu0 %v464
        %v586 = vpop.f32.mrb[0].mxu0
        %v587 = vadd.f32 0.0, %v586
        %v588 = vpop.f32.mrb[0].mxu0
        %589 = vmatprep.mubr.f32.mxu0 0.0
        %590 = vmatmul.mubr.f32.gmra.mrb[0].mxu0 %v465
        %v591 = vpop.f32.mrb[0].mxu0
        %v592 = vadd.f32 0.0, %v591
        %v593 = vpop.f32.mrb[0].mxu0
        %594 = vmatprep.mubr.f32.mxu0 0.0
        %595 = vmatmul.mubr.f32.gmra.mrb[0].mxu0 %v466
        %v596 = vpop.f32.mrb[0].mxu0
        %v597 = vadd.f32 0.0, %v596
        %v598 = vpop.f32.mrb[0].mxu0
        %599 = vmatprep.mubr.f32.mxu0 0.0
        %600 = vmatmul.mubr.f32.gmra.mrb[0].mxu0 %v467
        %v601 = vpop.f32.mrb[0].mxu0
        %v602 = vadd.f32 0.0, %v601
        %v603 = vpop.f32.mrb[0].mxu0
        %604 = vmatprep.mubr.f32.mxu0 0.0
        %605 = vmatmul.mubr.f32.gmra.mrb[0].mxu0 %v468
        %v606 = vpop.f32.mrb[0].mxu0
        %v607 = vadd.f32 0.0, %v606
        %v608 = vpop.f32.mrb[0].mxu0
        %609 = vmatprep.mubr.f32.mxu0 0.0
        %610 = vmatmul.mubr.f32.gmra.mrb[0].mxu0 %v469
        %v611 = vpop.f32.mrb[0].mxu0
        %v612 = vadd.f32 0.0, %v611
        %v613 = vpop.f32.mrb[0].mxu0
        %614 = vmatprep.mubr.f32.mxu0 0.0
        %615 = vmatmul.mubr.f32.gmra.mrb[0].mxu0 %v470
        %v616 = vpop.f32.mrb[0].mxu0
        %v617 = vadd.f32 0.0, %v616
        %v618 = vpop.f32.mrb[0].mxu0
        %619 = vmatprep.mubr.f32.mxu0 0.0
        %620 = vmatmul.mubr.f32.gmra.mrb[0].mxu0 %v471
        %v621 = vpop.f32.mrb[0].mxu0
        %v622 = vadd.f32 0.0, %v621
        %v623 = vpop.f32.mrb[0].mxu0
        %624 = vmatprep.mubr.f32.mxu0 0.0
        %625 = vmatmul.mubr.f32.gmra.mrb[0].mxu0 %v472
        %v626 = vpop.f32.mrb[0].mxu0
        %v627 = vadd.f32 0.0, %v626
        %v628 = vpop.f32.mrb[0].mxu0
        %629 = vmatprep.mubr.f32.mxu0 0.0
        %630 = vmatmul.mubr.f32.gmra.mrb[0].mxu0 %v473
        %v631 = vpop.f32.mrb[0].mxu0
        %v632 = vadd.f32 0.0, %v631
        %v633 = vpop.f32.mrb[0].mxu0
        %634 = vdwg.mxu0
        %635 = vst [vmem:[%s258] sm:$0xff] %v557
        %636 = vst [vmem:[%s258 + $0x8] sm:$0xff] %v562
        %637 = vst [vmem:[%s258 + $0x10] sm:$0xff] %v567
        %638 = vst [vmem:[%s258 + $0x18] sm:$0xff] %v572
        %639 = vst [vmem:[%s258 + $0x20] sm:$0xff] %v577
        %640 = vst [vmem:[%s258 + $0x28] sm:$0xff] %v582
        %641 = vst [vmem:[%s258 + $0x30] sm:$0xff] %v587
        %642 = vst [vmem:[%s258 + $0x38] sm:$0xff] %v592
        %643 = vst [vmem:[%s258 + $0x40] sm:$0xff] %v597
        %644 = vst [vmem:[%s258 + $0x48] sm:$0xff] %v602
        %645 = vst [vmem:[%s258 + $0x50] sm:$0xff] %v607
        %646 = vst [vmem:[%s258 + $0x58] sm:$0xff] %v612
        %647 = vst [vmem:[%s258 + $0x60] sm:$0xff] %v617
        %648 = vst [vmem:[%s258 + $0x68] sm:$0xff] %v622
        %649 = vst [vmem:[%s258 + $0x70] sm:$0xff] %v627
        %650 = vst [vmem:[%s258 + $0x78] sm:$0xff] %v632
        %s651 = sand.u32 %s118, 1
        %s652 = scalar_lea.sflag [#allocation5], %s651
        %s653 = sand.u32 %s118, 1
        %s654 = smul.addr %s653, 128
        %s655 = scalar_lea.vmem [#allocation9], %s654
        // Predicated region
        $region49: #{tpu_custom_call.1} parent=31 // pred_check
          %p656 = pneg %p128
        $region50: #{tpu_custom_call.1} parent=31 // pred_check_branch
          %658 = sbr.rel (%p656) target = $region52
        $region51: #{tpu_custom_call.1} parent=31 // pred_region
          %s659 = smul.u32 16, %s26
          %s661 = ssub.s32 2048, 2048
          %662 = vsyncadd %s652, %s661
          %s663 = smul.addr %s25, 16
          %s664 = sadd.s32 %s659, %s663
          %s665 = smul.addr %s664, 128
          %s666 = scalar_lea.hbm %s3, %s665
          %s667 = sshll.u32 %s655, 4
          %s668 = int_to_ptr.vmem [resolvable:$true] %s667
          %673 = dma.vmem_to_hbm [thread:$0]  %s668, 2048, %s666, %s652, 128, 128, 8
        $region52: #{tpu_custom_call.1} parent=31 // pred_fallthru
          _
      $region32: #{tpu_custom_call.1} parent=5 // pred_fallthru
        _
      %p674 = scmp.le.s32.totalorder 2, %s16
      // Predicated region
      $region53: #{tpu_custom_call.1} parent=5 // pred_check
        %p675 = pneg %p674
      $region54: #{tpu_custom_call.1} parent=5 // pred_check_branch
        %677 = sbr.rel (%p675) target = $region56
      $region55: #{tpu_custom_call.1} parent=5 // pred_region
        %s678 = ssub.s32 %s16, 2
        // Predicated region
        $region57: #{tpu_custom_call.1} parent=55 // pred_check
          %p679 = pneg %p134
        $region58: #{tpu_custom_call.1} parent=55 // pred_check_branch
          %681 = sbr.rel (%p679) target = $region60
        $region59: #{tpu_custom_call.1} parent=55 // pred_region
          %s682 = sand.u32 %s119, 1
          %s683 = scalar_lea.sflag [#allocation5], %s682
          %s684 = sand.u32 %s119, 1
          %s685 = smul.addr %s684, 128
          %s686 = scalar_lea.vmem [#allocation9], %s685
          %687 = dma.done %s683, 2048
        $region60: #{tpu_custom_call.1} parent=55 // pred_fallthru
          _
      $region56: #{tpu_custom_call.1} parent=5 // pred_fallthru
        _
    $region6: #{tpu_custom_call.1} parent=1 // loop_footer
      %s20 = sadd.s32 1, %s16
    $region7: #{tpu_custom_call.1} parent=1 // loop_footer_branch
      %15 = sbr.rel target = $region3
    $region8: #{tpu_custom_call.1} parent=1 // loop_exit
      _
    %688 = vsyncpa [#allocation4], 1
    %s689 = scalar_lea.sflag [#allocation4], 1
    %690 = vsyncpa %s689, 1
    %691 = vsyncpa [#allocation7], 1
    %692 = vsyncpa [#allocation5], 1
    %s693 = scalar_lea.sflag [#allocation5], 1
    %694 = vsyncpa %s693, 1

</llo_original>
